<compile_context>
chip_gen: v6e
topology: v6e:2x2x1
jax: 0.10.0
libtpu: 0.0.40
codegen_flags: <defaults>
</compile_context>

<pallas_src>
import functools

import numpy as np
import jax
import jax.numpy as jnp
from jax.experimental import pallas as pl
from jax.experimental.pallas import tpu as pltpu


def censored_rw_kernel(x_ref, out_ref, *, n_steps, n_nodes):
    """One grid step = one (8, BL) tile of samples.

    x_ref:   (n_steps * n_nodes, 8, BL) permuted logits; row r = i*N + c holds
             P[a_i, a_c] for every sample in the tile. Samples are packed onto
             (sublane, lane), so every per-sample scalar below is a full vreg slab.
    out_ref: (8, BL) per-sample log-likelihood (lane-dense, unmasked store).
    """
    n, N = n_steps, n_nodes

    def row(i, c):
        return x_ref[i * N + c].astype(jnp.float32)           # (8, BL) slab

    # t[i][c] = exp(x[i,c]) / sum_c' exp(x[i,c'])  (L1-normalised exp == row
    # softmax; row-max shift is mathematically identical, numerically stable).
    # Only rows 0..n-1 and columns 0..n are ever consumed downstream.
    t = []
    for i in range(n):
        xr = [row(i, c) for c in range(N)]
        xm = xr[0]
        for c in range(1, N):
            xm = jnp.maximum(xm, xr[c])
        e = [jnp.exp(xr[c] - xm) for c in range(N)]
        s = e[0]
        for c in range(1, N):
            s = s + e[c]
        inv_s = pl.reciprocal(s, approx=True)                  # EUP, off the VALU
        t.append([e[c] * inv_s for c in range(n + 1)])

    # Shared LU of B = I_n - T (T = t with zeroed diagonal, leading n x n block).
    # q_k is nested across k, so this single factorisation serves every step.
    # B is strictly diagonally dominant (off-diag row sums < 1) -> no pivoting.
    one = jnp.ones_like(t[0][0])
    A = [[(one if i == j else -t[i][j]) for j in range(n)] for i in range(n)]
    L = [[None] * n for _ in range(n)]
    for j in range(n - 1):
        inv_p = 1.0 / A[j][j]                                  # exact pivot recip
        for i in range(j + 1, n):
            lij = A[i][j] * inv_p
            L[i][j] = lij
            for c in range(j + 1, n):
                A[i][c] = A[i][c] - lij * A[j][c]
    # After elimination, A[k][k] == U[k][k].

    # Step k: p_k[k, k+1] = y[k] / U[k,k], where L y = t[0:k+1, k+1].
    lik = None
    for k in range(n):
        y = []
        for i in range(k + 1):
            acc = t[i][k + 1]
            for j in range(i):
                acc = acc - L[i][j] * y[j]
            y.append(acc)
        val = y[k] * pl.reciprocal(A[k][k], approx=True)       # only feeds log()
        term = jnp.log(val)
        lik = term if lik is None else lik + term

    out_ref[...] = lik
    # TODO(synk): for n_steps >~ 6, move the unrolled pivot/solve sweeps into
    # lax.fori_loop(..., unroll=True) over carried state to bound vreg pressure.


def censored_rw_loss(P, paths, *, lane_block=512, x_dtype=jnp.float32):
    """Pallas implementation of CensoredRW(N, sym=False).forward(paths).

    lane_block: lane width BL of one grid step; a step processes 8*BL samples
                (default 4096). Shrunk automatically for small batches; split
                so >=2 blocks exist when possible (v7x megacore).
    x_dtype:    dtype of the staged logits. jnp.bfloat16 halves HBM bytes
                (useful on v5e/v6e); float32 by default for exactness.
    """
    P = jnp.asarray(P, jnp.float32)
    N = P.shape[0]
    S = len(paths)
    n_steps = len(paths[0]) - 1
    for m in paths:
        assert len(m) == n_steps + 1, "all paths must have equal length here"
        assert len(set(m)) == len(m), "path nodes must be distinct"
    assert 1 <= n_steps and n_steps + 1 <= N

    # Per-sample permutation a = m + complement(m). The complement order does
    # not influence the likelihood (only rows < n_steps / full-row sums used).
    perm = np.stack(
        [np.array(list(m) + sorted(set(range(N)) - set(m)), dtype=np.int32)
         for m in paths])                                      # (S, N)
    permT = jnp.asarray(perm.T)                                # (N, S)

    # Gather only the rows that are ever read, directly batch-last: (n, N, S).
    xg = P[permT[:n_steps, None, :], permT[None, :, :]]        # (n, N, S)

    # Sample tiling: samples packed onto (sublane=8, lane=BL).
    per_lane = -(-S // 8)                                      # cdiv(S, 8)
    bl = max(128, min(lane_block, -(-per_lane // 128) * 128))
    num_blocks = -(-per_lane // bl)
    if num_blocks == 1 and bl >= 256:                          # v7x: feed both TCs
        bl = -(-(bl // 2) // 128) * 128
        num_blocks = -(-per_lane // bl)
    W = num_blocks * bl
    total = 8 * W

    x = xg.reshape(n_steps * N, S).astype(x_dtype)
    x = jnp.pad(x, ((0, 0), (0, total - S)))                   # padded lanes: zero logits
    x = x.reshape(n_steps * N, 8, W)

    kernel = functools.partial(censored_rw_kernel, n_steps=n_steps, n_nodes=N)

    # VMEM budget: double-buffered input block + output + in-kernel temporaries
    # (t slabs + LU scalars) with headroom; capped at 48 MiB for the v7x budget.
    slab = 8 * bl * 4
    in_bytes = n_steps * N * 8 * bl * jnp.dtype(x_dtype).itemsize
    tmp_bytes = (2 * n_steps * N + 3 * n_steps * n_steps + 16) * slab
    vmem_limit = int(min(48 << 20,
                         max(32 << 20,
                             2 * in_bytes + 2 * slab + tmp_bytes + (2 << 20))))

    out = pl.pallas_call(
        kernel,
        out_shape=jax.ShapeDtypeStruct((8, W), jnp.float32),
        grid_spec=pltpu.PrefetchScalarGridSpec(
            num_scalar_prefetch=0,
            grid=(num_blocks,),
            in_specs=[pl.BlockSpec((n_steps * N, 8, bl), lambda b: (0, 0, b))],
            out_specs=pl.BlockSpec((8, bl), lambda b: (0, b)),
        ),
        compiler_params=pltpu.CompilerParams(
            dimension_semantics=("parallel",),
            vmem_limit_bytes=vmem_limit),
    )(x)

    lik = out.reshape(-1)[:S]          # padded samples are dropped here
    # forward returns  -1 * sum(stack([like(m) for m in M]))
    return -jnp.sum(lik)


def censored_rw_loss_ref(P, paths):
    """Pure-JAX mirror of the torch forward (batched inverse), for validation."""
    P = jnp.asarray(P, jnp.float32)
    N = P.shape[0]
    n = len(paths[0]) - 1
    perm = np.stack(
        [np.array(list(m) + sorted(set(range(N)) - set(m)), dtype=np.int32)
         for m in paths])
    ri = jnp.arange(N)[:, None]
    ci = jnp.arange(N)[None, :]
    eye = jnp.eye(N, dtype=jnp.float32)

    def one(idx):
        t = jnp.exp(P[idx][:, idx])
        t = t / jnp.sum(t, axis=1, keepdims=True)
        t = t * (1.0 - eye)
        lik = jnp.float32(0.0)
        for k in range(n):
            q = jnp.where((ri <= k) & (ci <= k), t, 0.0)
            r = jnp.where((ri <= k) & (ci > k), t, 0.0)
            p = jnp.linalg.inv(eye - q) @ r
            lik = lik + jnp.log(p[k, k + 1])
        return lik

    liks = jax.vmap(one)(jnp.asarray(perm))
    return -jnp.sum(liks)


if __name__ == "__main__":
    key = jax.random.PRNGKey(0)
    N = 8                                # number of graph nodes (module's N)
    P = jax.random.uniform(key, (N, N), dtype=jnp.float32)   # torch.rand(N, N)

    # Case 1: tiny batch — 3 paths of length 5 (4 transitions each).
    paths_small = [
        [0, 3, 5, 2, 7],
        [1, 4, 6, 0, 3],
        [2, 5, 1, 7, 4],
    ]
    loss = jax.block_until_ready(censored_rw_loss(P, paths_small))
    ref = jax.block_until_ready(censored_rw_loss_ref(P, paths_small))
    np.testing.assert_allclose(float(loss), float(ref), rtol=1e-3, atol=1e-3)

    # Case 2: a few hundred paths so several sublane rows of the sample tile
    # are populated (exercises the (8, lane) sample packing and padding).
    rng = np.random.RandomState(0)
    paths_big = [list(rng.choice(N, size=5, replace=False)) for _ in range(300)]
    loss2 = jax.block_until_ready(censored_rw_loss(P, paths_big))
    ref2 = jax.block_until_ready(censored_rw_loss_ref(P, paths_big))
    np.testing.assert_allclose(float(loss2), float(ref2), rtol=1e-3, atol=1e-3)

    assert np.isfinite(float(loss)) and np.isfinite(float(loss2))
    print("KERNEL_OK")
</pallas_src>

<mosaic_0001>
module attributes {stable_mosaic.version = 11 : i64} {
  func.func @censored_rw_kernel(%arg0: i32, %arg1: memref<32x8x128xf32, #tpu.memory_space<vmem>>, %arg2: memref<8x128xf32, #tpu.memory_space<vmem>>) attributes {dimension_semantics = [#tpu.dimension_semantics<parallel>], iteration_bounds = array<i64: 1>, scalar_prefetch = 0 : i64, scratch_operands = 0 : i64, tpu.core_type = #tpu.core_type<tc>, window_params = [{transform_indices = @transform_0, window_bounds = array<i64: 32, 8, 128>}, {transform_indices = @transform_1, window_bounds = array<i64: 8, 128>}]} {
    %c0 = arith.constant 0 : index
    %c0_0 = arith.constant 0 : index
    %c0_1 = arith.constant 0 : index
    %0 = vector.load %arg1[%c0, %c0_0, %c0_1] : memref<32x8x128xf32, #tpu.memory_space<vmem>>, vector<1x8x128xf32>
    %1 = vector.shape_cast %0 : vector<1x8x128xf32> to vector<8x128xf32>
    %c1 = arith.constant 1 : index
    %c0_2 = arith.constant 0 : index
    %c0_3 = arith.constant 0 : index
    %2 = vector.load %arg1[%c1, %c0_2, %c0_3] : memref<32x8x128xf32, #tpu.memory_space<vmem>>, vector<1x8x128xf32>
    %3 = vector.shape_cast %2 : vector<1x8x128xf32> to vector<8x128xf32>
    %c2 = arith.constant 2 : index
    %c0_4 = arith.constant 0 : index
    %c0_5 = arith.constant 0 : index
    %4 = vector.load %arg1[%c2, %c0_4, %c0_5] : memref<32x8x128xf32, #tpu.memory_space<vmem>>, vector<1x8x128xf32>
    %5 = vector.shape_cast %4 : vector<1x8x128xf32> to vector<8x128xf32>
    %c3 = arith.constant 3 : index
    %c0_6 = arith.constant 0 : index
    %c0_7 = arith.constant 0 : index
    %6 = vector.load %arg1[%c3, %c0_6, %c0_7] : memref<32x8x128xf32, #tpu.memory_space<vmem>>, vector<1x8x128xf32>
    %7 = vector.shape_cast %6 : vector<1x8x128xf32> to vector<8x128xf32>
    %c4 = arith.constant 4 : index
    %c0_8 = arith.constant 0 : index
    %c0_9 = arith.constant 0 : index
    %8 = vector.load %arg1[%c4, %c0_8, %c0_9] : memref<32x8x128xf32, #tpu.memory_space<vmem>>, vector<1x8x128xf32>
    %9 = vector.shape_cast %8 : vector<1x8x128xf32> to vector<8x128xf32>
    %c5 = arith.constant 5 : index
    %c0_10 = arith.constant 0 : index
    %c0_11 = arith.constant 0 : index
    %10 = vector.load %arg1[%c5, %c0_10, %c0_11] : memref<32x8x128xf32, #tpu.memory_space<vmem>>, vector<1x8x128xf32>
    %11 = vector.shape_cast %10 : vector<1x8x128xf32> to vector<8x128xf32>
    %c6 = arith.constant 6 : index
    %c0_12 = arith.constant 0 : index
    %c0_13 = arith.constant 0 : index
    %12 = vector.load %arg1[%c6, %c0_12, %c0_13] : memref<32x8x128xf32, #tpu.memory_space<vmem>>, vector<1x8x128xf32>
    %13 = vector.shape_cast %12 : vector<1x8x128xf32> to vector<8x128xf32>
    %c7 = arith.constant 7 : index
    %c0_14 = arith.constant 0 : index
    %c0_15 = arith.constant 0 : index
    %14 = vector.load %arg1[%c7, %c0_14, %c0_15] : memref<32x8x128xf32, #tpu.memory_space<vmem>>, vector<1x8x128xf32>
    %15 = vector.shape_cast %14 : vector<1x8x128xf32> to vector<8x128xf32>
    %16 = arith.maximumf %1, %3 : vector<8x128xf32>
    %17 = arith.maximumf %16, %5 : vector<8x128xf32>
    %18 = arith.maximumf %17, %7 : vector<8x128xf32>
    %19 = arith.maximumf %18, %9 : vector<8x128xf32>
    %20 = arith.maximumf %19, %11 : vector<8x128xf32>
    %21 = arith.maximumf %20, %13 : vector<8x128xf32>
    %22 = arith.maximumf %21, %15 : vector<8x128xf32>
    %23 = arith.subf %1, %22 : vector<8x128xf32>
    %24 = math.exp %23 : vector<8x128xf32>
    %25 = arith.subf %3, %22 : vector<8x128xf32>
    %26 = math.exp %25 : vector<8x128xf32>
    %27 = arith.subf %5, %22 : vector<8x128xf32>
    %28 = math.exp %27 : vector<8x128xf32>
    %29 = arith.subf %7, %22 : vector<8x128xf32>
    %30 = math.exp %29 : vector<8x128xf32>
    %31 = arith.subf %9, %22 : vector<8x128xf32>
    %32 = math.exp %31 : vector<8x128xf32>
    %33 = arith.subf %11, %22 : vector<8x128xf32>
    %34 = math.exp %33 : vector<8x128xf32>
    %35 = arith.subf %13, %22 : vector<8x128xf32>
    %36 = math.exp %35 : vector<8x128xf32>
    %37 = arith.subf %15, %22 : vector<8x128xf32>
    %38 = math.exp %37 : vector<8x128xf32>
    %39 = arith.addf %24, %26 : vector<8x128xf32>
    %40 = arith.addf %39, %28 : vector<8x128xf32>
    %41 = arith.addf %40, %30 : vector<8x128xf32>
    %42 = arith.addf %41, %32 : vector<8x128xf32>
    %43 = arith.addf %42, %34 : vector<8x128xf32>
    %44 = arith.addf %43, %36 : vector<8x128xf32>
    %45 = arith.addf %44, %38 : vector<8x128xf32>
    %46 = tpu.reciprocal %45 {approx = true} : vector<8x128xf32> -> vector<8x128xf32>
    %47 = arith.mulf %26, %46 : vector<8x128xf32>
    %48 = arith.mulf %28, %46 : vector<8x128xf32>
    %49 = arith.mulf %30, %46 : vector<8x128xf32>
    %50 = arith.mulf %32, %46 : vector<8x128xf32>
    %c8 = arith.constant 8 : index
    %c0_16 = arith.constant 0 : index
    %c0_17 = arith.constant 0 : index
    %51 = vector.load %arg1[%c8, %c0_16, %c0_17] : memref<32x8x128xf32, #tpu.memory_space<vmem>>, vector<1x8x128xf32>
    %52 = vector.shape_cast %51 : vector<1x8x128xf32> to vector<8x128xf32>
    %c9 = arith.constant 9 : index
    %c0_18 = arith.constant 0 : index
    %c0_19 = arith.constant 0 : index
    %53 = vector.load %arg1[%c9, %c0_18, %c0_19] : memref<32x8x128xf32, #tpu.memory_space<vmem>>, vector<1x8x128xf32>
    %54 = vector.shape_cast %53 : vector<1x8x128xf32> to vector<8x128xf32>
    %c10 = arith.constant 10 : index
    %c0_20 = arith.constant 0 : index
    %c0_21 = arith.constant 0 : index
    %55 = vector.load %arg1[%c10, %c0_20, %c0_21] : memref<32x8x128xf32, #tpu.memory_space<vmem>>, vector<1x8x128xf32>
    %56 = vector.shape_cast %55 : vector<1x8x128xf32> to vector<8x128xf32>
    %c11 = arith.constant 11 : index
    %c0_22 = arith.constant 0 : index
    %c0_23 = arith.constant 0 : index
    %57 = vector.load %arg1[%c11, %c0_22, %c0_23] : memref<32x8x128xf32, #tpu.memory_space<vmem>>, vector<1x8x128xf32>
    %58 = vector.shape_cast %57 : vector<1x8x128xf32> to vector<8x128xf32>
    %c12 = arith.constant 12 : index
    %c0_24 = arith.constant 0 : index
    %c0_25 = arith.constant 0 : index
    %59 = vector.load %arg1[%c12, %c0_24, %c0_25] : memref<32x8x128xf32, #tpu.memory_space<vmem>>, vector<1x8x128xf32>
    %60 = vector.shape_cast %59 : vector<1x8x128xf32> to vector<8x128xf32>
    %c13 = arith.constant 13 : index
    %c0_26 = arith.constant 0 : index
    %c0_27 = arith.constant 0 : index
    %61 = vector.load %arg1[%c13, %c0_26, %c0_27] : memref<32x8x128xf32, #tpu.memory_space<vmem>>, vector<1x8x128xf32>
    %62 = vector.shape_cast %61 : vector<1x8x128xf32> to vector<8x128xf32>
    %c14 = arith.constant 14 : index
    %c0_28 = arith.constant 0 : index
    %c0_29 = arith.constant 0 : index
    %63 = vector.load %arg1[%c14, %c0_28, %c0_29] : memref<32x8x128xf32, #tpu.memory_space<vmem>>, vector<1x8x128xf32>
    %64 = vector.shape_cast %63 : vector<1x8x128xf32> to vector<8x128xf32>
    %c15 = arith.constant 15 : index
    %c0_30 = arith.constant 0 : index
    %c0_31 = arith.constant 0 : index
    %65 = vector.load %arg1[%c15, %c0_30, %c0_31] : memref<32x8x128xf32, #tpu.memory_space<vmem>>, vector<1x8x128xf32>
    %66 = vector.shape_cast %65 : vector<1x8x128xf32> to vector<8x128xf32>
    %67 = arith.maximumf %52, %54 : vector<8x128xf32>
    %68 = arith.maximumf %67, %56 : vector<8x128xf32>
    %69 = arith.maximumf %68, %58 : vector<8x128xf32>
    %70 = arith.maximumf %69, %60 : vector<8x128xf32>
    %71 = arith.maximumf %70, %62 : vector<8x128xf32>
    %72 = arith.maximumf %71, %64 : vector<8x128xf32>
    %73 = arith.maximumf %72, %66 : vector<8x128xf32>
    %74 = arith.subf %52, %73 : vector<8x128xf32>
    %75 = math.exp %74 : vector<8x128xf32>
    %76 = arith.subf %54, %73 : vector<8x128xf32>
    %77 = math.exp %76 : vector<8x128xf32>
    %78 = arith.subf %56, %73 : vector<8x128xf32>
    %79 = math.exp %78 : vector<8x128xf32>
    %80 = arith.subf %58, %73 : vector<8x128xf32>
    %81 = math.exp %80 : vector<8x128xf32>
    %82 = arith.subf %60, %73 : vector<8x128xf32>
    %83 = math.exp %82 : vector<8x128xf32>
    %84 = arith.subf %62, %73 : vector<8x128xf32>
    %85 = math.exp %84 : vector<8x128xf32>
    %86 = arith.subf %64, %73 : vector<8x128xf32>
    %87 = math.exp %86 : vector<8x128xf32>
    %88 = arith.subf %66, %73 : vector<8x128xf32>
    %89 = math.exp %88 : vector<8x128xf32>
    %90 = arith.addf %75, %77 : vector<8x128xf32>
    %91 = arith.addf %90, %79 : vector<8x128xf32>
    %92 = arith.addf %91, %81 : vector<8x128xf32>
    %93 = arith.addf %92, %83 : vector<8x128xf32>
    %94 = arith.addf %93, %85 : vector<8x128xf32>
    %95 = arith.addf %94, %87 : vector<8x128xf32>
    %96 = arith.addf %95, %89 : vector<8x128xf32>
    %97 = tpu.reciprocal %96 {approx = true} : vector<8x128xf32> -> vector<8x128xf32>
    %98 = arith.mulf %75, %97 : vector<8x128xf32>
    %99 = arith.mulf %79, %97 : vector<8x128xf32>
    %100 = arith.mulf %81, %97 : vector<8x128xf32>
    %101 = arith.mulf %83, %97 : vector<8x128xf32>
    %c16 = arith.constant 16 : index
    %c0_32 = arith.constant 0 : index
    %c0_33 = arith.constant 0 : index
    %102 = vector.load %arg1[%c16, %c0_32, %c0_33] : memref<32x8x128xf32, #tpu.memory_space<vmem>>, vector<1x8x128xf32>
    %103 = vector.shape_cast %102 : vector<1x8x128xf32> to vector<8x128xf32>
    %c17 = arith.constant 17 : index
    %c0_34 = arith.constant 0 : index
    %c0_35 = arith.constant 0 : index
    %104 = vector.load %arg1[%c17, %c0_34, %c0_35] : memref<32x8x128xf32, #tpu.memory_space<vmem>>, vector<1x8x128xf32>
    %105 = vector.shape_cast %104 : vector<1x8x128xf32> to vector<8x128xf32>
    %c18 = arith.constant 18 : index
    %c0_36 = arith.constant 0 : index
    %c0_37 = arith.constant 0 : index
    %106 = vector.load %arg1[%c18, %c0_36, %c0_37] : memref<32x8x128xf32, #tpu.memory_space<vmem>>, vector<1x8x128xf32>
    %107 = vector.shape_cast %106 : vector<1x8x128xf32> to vector<8x128xf32>
    %c19 = arith.constant 19 : index
    %c0_38 = arith.constant 0 : index
    %c0_39 = arith.constant 0 : index
    %108 = vector.load %arg1[%c19, %c0_38, %c0_39] : memref<32x8x128xf32, #tpu.memory_space<vmem>>, vector<1x8x128xf32>
    %109 = vector.shape_cast %108 : vector<1x8x128xf32> to vector<8x128xf32>
    %c20 = arith.constant 20 : index
    %c0_40 = arith.constant 0 : index
    %c0_41 = arith.constant 0 : index
    %110 = vector.load %arg1[%c20, %c0_40, %c0_41] : memref<32x8x128xf32, #tpu.memory_space<vmem>>, vector<1x8x128xf32>
    %111 = vector.shape_cast %110 : vector<1x8x128xf32> to vector<8x128xf32>
    %c21 = arith.constant 21 : index
    %c0_42 = arith.constant 0 : index
    %c0_43 = arith.constant 0 : index
    %112 = vector.load %arg1[%c21, %c0_42, %c0_43] : memref<32x8x128xf32, #tpu.memory_space<vmem>>, vector<1x8x128xf32>
    %113 = vector.shape_cast %112 : vector<1x8x128xf32> to vector<8x128xf32>
    %c22 = arith.constant 22 : index
    %c0_44 = arith.constant 0 : index
    %c0_45 = arith.constant 0 : index
    %114 = vector.load %arg1[%c22, %c0_44, %c0_45] : memref<32x8x128xf32, #tpu.memory_space<vmem>>, vector<1x8x128xf32>
    %115 = vector.shape_cast %114 : vector<1x8x128xf32> to vector<8x128xf32>
    %c23 = arith.constant 23 : index
    %c0_46 = arith.constant 0 : index
    %c0_47 = arith.constant 0 : index
    %116 = vector.load %arg1[%c23, %c0_46, %c0_47] : memref<32x8x128xf32, #tpu.memory_space<vmem>>, vector<1x8x128xf32>
    %117 = vector.shape_cast %116 : vector<1x8x128xf32> to vector<8x128xf32>
    %118 = arith.maximumf %103, %105 : vector<8x128xf32>
    %119 = arith.maximumf %118, %107 : vector<8x128xf32>
    %120 = arith.maximumf %119, %109 : vector<8x128xf32>
    %121 = arith.maximumf %120, %111 : vector<8x128xf32>
    %122 = arith.maximumf %121, %113 : vector<8x128xf32>
    %123 = arith.maximumf %122, %115 : vector<8x128xf32>
    %124 = arith.maximumf %123, %117 : vector<8x128xf32>
    %125 = arith.subf %103, %124 : vector<8x128xf32>
    %126 = math.exp %125 : vector<8x128xf32>
    %127 = arith.subf %105, %124 : vector<8x128xf32>
    %128 = math.exp %127 : vector<8x128xf32>
    %129 = arith.subf %107, %124 : vector<8x128xf32>
    %130 = math.exp %129 : vector<8x128xf32>
    %131 = arith.subf %109, %124 : vector<8x128xf32>
    %132 = math.exp %131 : vector<8x128xf32>
    %133 = arith.subf %111, %124 : vector<8x128xf32>
    %134 = math.exp %133 : vector<8x128xf32>
    %135 = arith.subf %113, %124 : vector<8x128xf32>
    %136 = math.exp %135 : vector<8x128xf32>
    %137 = arith.subf %115, %124 : vector<8x128xf32>
    %138 = math.exp %137 : vector<8x128xf32>
    %139 = arith.subf %117, %124 : vector<8x128xf32>
    %140 = math.exp %139 : vector<8x128xf32>
    %141 = arith.addf %126, %128 : vector<8x128xf32>
    %142 = arith.addf %141, %130 : vector<8x128xf32>
    %143 = arith.addf %142, %132 : vector<8x128xf32>
    %144 = arith.addf %143, %134 : vector<8x128xf32>
    %145 = arith.addf %144, %136 : vector<8x128xf32>
    %146 = arith.addf %145, %138 : vector<8x128xf32>
    %147 = arith.addf %146, %140 : vector<8x128xf32>
    %148 = tpu.reciprocal %147 {approx = true} : vector<8x128xf32> -> vector<8x128xf32>
    %149 = arith.mulf %126, %148 : vector<8x128xf32>
    %150 = arith.mulf %128, %148 : vector<8x128xf32>
    %151 = arith.mulf %132, %148 : vector<8x128xf32>
    %152 = arith.mulf %134, %148 : vector<8x128xf32>
    %c24 = arith.constant 24 : index
    %c0_48 = arith.constant 0 : index
    %c0_49 = arith.constant 0 : index
    %153 = vector.load %arg1[%c24, %c0_48, %c0_49] : memref<32x8x128xf32, #tpu.memory_space<vmem>>, vector<1x8x128xf32>
    %154 = vector.shape_cast %153 : vector<1x8x128xf32> to vector<8x128xf32>
    %c25 = arith.constant 25 : index
    %c0_50 = arith.constant 0 : index
    %c0_51 = arith.constant 0 : index
    %155 = vector.load %arg1[%c25, %c0_50, %c0_51] : memref<32x8x128xf32, #tpu.memory_space<vmem>>, vector<1x8x128xf32>
    %156 = vector.shape_cast %155 : vector<1x8x128xf32> to vector<8x128xf32>
    %c26 = arith.constant 26 : index
    %c0_52 = arith.constant 0 : index
    %c0_53 = arith.constant 0 : index
    %157 = vector.load %arg1[%c26, %c0_52, %c0_53] : memref<32x8x128xf32, #tpu.memory_space<vmem>>, vector<1x8x128xf32>
    %158 = vector.shape_cast %157 : vector<1x8x128xf32> to vector<8x128xf32>
    %c27 = arith.constant 27 : index
    %c0_54 = arith.constant 0 : index
    %c0_55 = arith.constant 0 : index
    %159 = vector.load %arg1[%c27, %c0_54, %c0_55] : memref<32x8x128xf32, #tpu.memory_space<vmem>>, vector<1x8x128xf32>
    %160 = vector.shape_cast %159 : vector<1x8x128xf32> to vector<8x128xf32>
    %c28 = arith.constant 28 : index
    %c0_56 = arith.constant 0 : index
    %c0_57 = arith.constant 0 : index
    %161 = vector.load %arg1[%c28, %c0_56, %c0_57] : memref<32x8x128xf32, #tpu.memory_space<vmem>>, vector<1x8x128xf32>
    %162 = vector.shape_cast %161 : vector<1x8x128xf32> to vector<8x128xf32>
    %c29 = arith.constant 29 : index
    %c0_58 = arith.constant 0 : index
    %c0_59 = arith.constant 0 : index
    %163 = vector.load %arg1[%c29, %c0_58, %c0_59] : memref<32x8x128xf32, #tpu.memory_space<vmem>>, vector<1x8x128xf32>
    %164 = vector.shape_cast %163 : vector<1x8x128xf32> to vector<8x128xf32>
    %c30 = arith.constant 30 : index
    %c0_60 = arith.constant 0 : index
    %c0_61 = arith.constant 0 : index
    %165 = vector.load %arg1[%c30, %c0_60, %c0_61] : memref<32x8x128xf32, #tpu.memory_space<vmem>>, vector<1x8x128xf32>
    %166 = vector.shape_cast %165 : vector<1x8x128xf32> to vector<8x128xf32>
    %c31 = arith.constant 31 : index
    %c0_62 = arith.constant 0 : index
    %c0_63 = arith.constant 0 : index
    %167 = vector.load %arg1[%c31, %c0_62, %c0_63] : memref<32x8x128xf32, #tpu.memory_space<vmem>>, vector<1x8x128xf32>
    %168 = vector.shape_cast %167 : vector<1x8x128xf32> to vector<8x128xf32>
    %169 = arith.maximumf %154, %156 : vector<8x128xf32>
    %170 = arith.maximumf %169, %158 : vector<8x128xf32>
    %171 = arith.maximumf %170, %160 : vector<8x128xf32>
    %172 = arith.maximumf %171, %162 : vector<8x128xf32>
    %173 = arith.maximumf %172, %164 : vector<8x128xf32>
    %174 = arith.maximumf %173, %166 : vector<8x128xf32>
    %175 = arith.maximumf %174, %168 : vector<8x128xf32>
    %176 = arith.subf %154, %175 : vector<8x128xf32>
    %177 = math.exp %176 : vector<8x128xf32>
    %178 = arith.subf %156, %175 : vector<8x128xf32>
    %179 = math.exp %178 : vector<8x128xf32>
    %180 = arith.subf %158, %175 : vector<8x128xf32>
    %181 = math.exp %180 : vector<8x128xf32>
    %182 = arith.subf %160, %175 : vector<8x128xf32>
    %183 = math.exp %182 : vector<8x128xf32>
    %184 = arith.subf %162, %175 : vector<8x128xf32>
    %185 = math.exp %184 : vector<8x128xf32>
    %186 = arith.subf %164, %175 : vector<8x128xf32>
    %187 = math.exp %186 : vector<8x128xf32>
    %188 = arith.subf %166, %175 : vector<8x128xf32>
    %189 = math.exp %188 : vector<8x128xf32>
    %190 = arith.subf %168, %175 : vector<8x128xf32>
    %191 = math.exp %190 : vector<8x128xf32>
    %192 = arith.addf %177, %179 : vector<8x128xf32>
    %193 = arith.addf %192, %181 : vector<8x128xf32>
    %194 = arith.addf %193, %183 : vector<8x128xf32>
    %195 = arith.addf %194, %185 : vector<8x128xf32>
    %196 = arith.addf %195, %187 : vector<8x128xf32>
    %197 = arith.addf %196, %189 : vector<8x128xf32>
    %198 = arith.addf %197, %191 : vector<8x128xf32>
    %199 = tpu.reciprocal %198 {approx = true} : vector<8x128xf32> -> vector<8x128xf32>
    %200 = arith.mulf %177, %199 : vector<8x128xf32>
    %201 = arith.mulf %179, %199 : vector<8x128xf32>
    %202 = arith.mulf %181, %199 : vector<8x128xf32>
    %203 = arith.mulf %185, %199 : vector<8x128xf32>
    %cst = arith.constant 1.000000e+00 : f32
    %204 = vector.broadcast %cst : f32 to vector<8x128xf32>
    %cst_64 = arith.constant 0.000000e+00 : f32
    %205 = vector.broadcast %cst_64 : f32 to vector<8x128xf32>
    %206 = arith.subf %205, %47 : vector<8x128xf32>
    %cst_65 = arith.constant 0.000000e+00 : f32
    %207 = vector.broadcast %cst_65 : f32 to vector<8x128xf32>
    %208 = arith.subf %207, %48 : vector<8x128xf32>
    %cst_66 = arith.constant 0.000000e+00 : f32
    %209 = vector.broadcast %cst_66 : f32 to vector<8x128xf32>
    %210 = arith.subf %209, %49 : vector<8x128xf32>
    %cst_67 = arith.constant 0.000000e+00 : f32
    %211 = vector.broadcast %cst_67 : f32 to vector<8x128xf32>
    %212 = arith.subf %211, %98 : vector<8x128xf32>
    %cst_68 = arith.constant 0.000000e+00 : f32
    %213 = vector.broadcast %cst_68 : f32 to vector<8x128xf32>
    %214 = arith.subf %213, %99 : vector<8x128xf32>
    %cst_69 = arith.constant 0.000000e+00 : f32
    %215 = vector.broadcast %cst_69 : f32 to vector<8x128xf32>
    %216 = arith.subf %215, %100 : vector<8x128xf32>
    %cst_70 = arith.constant 0.000000e+00 : f32
    %217 = vector.broadcast %cst_70 : f32 to vector<8x128xf32>
    %218 = arith.subf %217, %149 : vector<8x128xf32>
    %cst_71 = arith.constant 0.000000e+00 : f32
    %219 = vector.broadcast %cst_71 : f32 to vector<8x128xf32>
    %220 = arith.subf %219, %150 : vector<8x128xf32>
    %cst_72 = arith.constant 0.000000e+00 : f32
    %221 = vector.broadcast %cst_72 : f32 to vector<8x128xf32>
    %222 = arith.subf %221, %151 : vector<8x128xf32>
    %cst_73 = arith.constant 0.000000e+00 : f32
    %223 = vector.broadcast %cst_73 : f32 to vector<8x128xf32>
    %224 = arith.subf %223, %200 : vector<8x128xf32>
    %cst_74 = arith.constant 0.000000e+00 : f32
    %225 = vector.broadcast %cst_74 : f32 to vector<8x128xf32>
    %226 = arith.subf %225, %201 : vector<8x128xf32>
    %cst_75 = arith.constant 0.000000e+00 : f32
    %227 = vector.broadcast %cst_75 : f32 to vector<8x128xf32>
    %228 = arith.subf %227, %202 : vector<8x128xf32>
    %cst_76 = arith.constant 1.000000e+00 : f32
    %229 = vector.broadcast %cst_76 : f32 to vector<8x128xf32>
    %230 = arith.divf %229, %204 : vector<8x128xf32>
    %231 = arith.mulf %212, %230 : vector<8x128xf32>
    %232 = arith.mulf %231, %206 : vector<8x128xf32>
    %233 = arith.subf %204, %232 : vector<8x128xf32>
    %234 = arith.mulf %231, %208 : vector<8x128xf32>
    %235 = arith.subf %214, %234 : vector<8x128xf32>
    %236 = arith.mulf %231, %210 : vector<8x128xf32>
    %237 = arith.subf %216, %236 : vector<8x128xf32>
    %238 = arith.mulf %218, %230 : vector<8x128xf32>
    %239 = arith.mulf %238, %206 : vector<8x128xf32>
    %240 = arith.subf %220, %239 : vector<8x128xf32>
    %241 = arith.mulf %238, %208 : vector<8x128xf32>
    %242 = arith.subf %204, %241 : vector<8x128xf32>
    %243 = arith.mulf %238, %210 : vector<8x128xf32>
    %244 = arith.subf %222, %243 : vector<8x128xf32>
    %245 = arith.mulf %224, %230 : vector<8x128xf32>
    %246 = arith.mulf %245, %206 : vector<8x128xf32>
    %247 = arith.subf %226, %246 : vector<8x128xf32>
    %248 = arith.mulf %245, %208 : vector<8x128xf32>
    %249 = arith.subf %228, %248 : vector<8x128xf32>
    %250 = arith.mulf %245, %210 : vector<8x128xf32>
    %251 = arith.subf %204, %250 : vector<8x128xf32>
    %cst_77 = arith.constant 1.000000e+00 : f32
    %252 = vector.broadcast %cst_77 : f32 to vector<8x128xf32>
    %253 = arith.divf %252, %233 : vector<8x128xf32>
    %254 = arith.mulf %240, %253 : vector<8x128xf32>
    %255 = arith.mulf %254, %235 : vector<8x128xf32>
    %256 = arith.subf %242, %255 : vector<8x128xf32>
    %257 = arith.mulf %254, %237 : vector<8x128xf32>
    %258 = arith.subf %244, %257 : vector<8x128xf32>
    %259 = arith.mulf %247, %253 : vector<8x128xf32>
    %260 = arith.mulf %259, %235 : vector<8x128xf32>
    %261 = arith.subf %249, %260 : vector<8x128xf32>
    %262 = arith.mulf %259, %237 : vector<8x128xf32>
    %263 = arith.subf %251, %262 : vector<8x128xf32>
    %cst_78 = arith.constant 1.000000e+00 : f32
    %264 = vector.broadcast %cst_78 : f32 to vector<8x128xf32>
    %265 = arith.divf %264, %256 : vector<8x128xf32>
    %266 = arith.mulf %261, %265 : vector<8x128xf32>
    %267 = arith.mulf %266, %258 : vector<8x128xf32>
    %268 = arith.subf %263, %267 : vector<8x128xf32>
    %269 = tpu.reciprocal %204 {approx = true} : vector<8x128xf32> -> vector<8x128xf32>
    %270 = arith.mulf %47, %269 : vector<8x128xf32>
    %271 = math.log %270 : vector<8x128xf32>
    %272 = arith.mulf %231, %48 : vector<8x128xf32>
    %273 = arith.subf %99, %272 : vector<8x128xf32>
    %274 = tpu.reciprocal %233 {approx = true} : vector<8x128xf32> -> vector<8x128xf32>
    %275 = arith.mulf %273, %274 : vector<8x128xf32>
    %276 = math.log %275 : vector<8x128xf32>
    %277 = arith.addf %271, %276 : vector<8x128xf32>
    %278 = arith.mulf %231, %49 : vector<8x128xf32>
    %279 = arith.subf %100, %278 : vector<8x128xf32>
    %280 = arith.mulf %238, %49 : vector<8x128xf32>
    %281 = arith.subf %151, %280 : vector<8x128xf32>
    %282 = arith.mulf %254, %279 : vector<8x128xf32>
    %283 = arith.subf %281, %282 : vector<8x128xf32>
    %284 = tpu.reciprocal %256 {approx = true} : vector<8x128xf32> -> vector<8x128xf32>
    %285 = arith.mulf %283, %284 : vector<8x128xf32>
    %286 = math.log %285 : vector<8x128xf32>
    %287 = arith.addf %277, %286 : vector<8x128xf32>
    %288 = arith.mulf %231, %50 : vector<8x128xf32>
    %289 = arith.subf %101, %288 : vector<8x128xf32>
    %290 = arith.mulf %238, %50 : vector<8x128xf32>
    %291 = arith.subf %152, %290 : vector<8x128xf32>
    %292 = arith.mulf %254, %289 : vector<8x128xf32>
    %293 = arith.subf %291, %292 : vector<8x128xf32>
    %294 = arith.mulf %245, %50 : vector<8x128xf32>
    %295 = arith.subf %203, %294 : vector<8x128xf32>
    %296 = arith.mulf %259, %289 : vector<8x128xf32>
    %297 = arith.subf %295, %296 : vector<8x128xf32>
    %298 = arith.mulf %266, %293 : vector<8x128xf32>
    %299 = arith.subf %297, %298 : vector<8x128xf32>
    %300 = tpu.reciprocal %268 {approx = true} : vector<8x128xf32> -> vector<8x128xf32>
    %301 = arith.mulf %299, %300 : vector<8x128xf32>
    %302 = math.log %301 : vector<8x128xf32>
    %303 = arith.addf %287, %302 : vector<8x128xf32>
    %c0_79 = arith.constant 0 : index
    %c0_80 = arith.constant 0 : index
    %304 = vector.load %arg2[%c0_79, %c0_80] : memref<8x128xf32, #tpu.memory_space<vmem>>, vector<8x128xf32>
    tpu.vector_store %arg2[%c0_79, %c0_80], %303 {strides = array<i32>} : memref<8x128xf32, #tpu.memory_space<vmem>>, vector<8x128xf32>,
    return
  }
  func.func @transform_0(%arg0: i32) -> (i32, i32, i32) {
    %c0_i32 = arith.constant 0 : i32
    %c0_i32_0 = arith.constant 0 : i32
    %c0_i32_1 = arith.constant 0 : i32
    return %c0_i32, %c0_i32_0, %arg0 : i32, i32, i32
  }
  func.func @transform_1(%arg0: i32) -> (i32, i32) {
    %c0_i32 = arith.constant 0 : i32
    %c0_i32_0 = arith.constant 0 : i32
    return %c0_i32, %arg0 : i32, i32
  }
}

</mosaic_0001>

<llo_original>
// kernel: tpu_custom_call.1
$region0: #{tpu_custom_call.1}
  #allocation0 [shape = 'u32[]', space=smem, size = 0x4, offset = 0x4, fixed_abs, tag = 'smem constant byte address 0x4 - core index']
  #allocation1 [shape = 'u32[144,128]{1,0:T(1,128)}', space=vmem, size = 0x12000, scoped, tag = 'internal scratch']
  %s0 = inlined_call_operand.hbm [shape: f32[32,8,128], index: 0, kind: input, shape index: {}]
  %s1 = inlined_call_operand.hbm [shape: f32[8,128], index: 1, kind: output, shape index: {}]
  %s2 = sld [smem:[#allocation0]]
  $region18: #{tpu_custom_call.1} parent=0
    _
  %s4 = ssub.s32 1, %s2
  %s5 = scalar_select 0, %s4, %s2
  $region1: #{tpu_custom_call.1} parent=0
    #allocation2 [shape = 'u8[131072]{0}', space=vmem, size = 0x20000, scoped, tag = 'input window, operand 0, single buffered']
    #allocation3 [shape = 's32[1]{0}', space=sflag, size = 0x4, scoped, tag = 'scoped memory for tpu_custom_call.1']
    #allocation4 [shape = 's32[1]{0}', space=sflag, size = 0x4, scoped, tag = 'scoped memory for tpu_custom_call.1']
    #allocation5 [shape = 'u8[4096]{0}', space=vmem, size = 0x1000, scoped, tag = 'output window, operand 0, single buffered']
    %6 = vsyncpa [#allocation3], 0
    %7 = vsyncpa [#allocation4], 0
    // Predicated region
    $region2: #{tpu_custom_call.1} parent=1 // pred_check
      _
    $region3: #{tpu_custom_call.1} parent=1 // pred_check_branch
      %9 = sbr.rel (0) target = $region5
    $region4: #{tpu_custom_call.1} parent=1 // pred_region
      %s11 = ssub.s32 4096, 4096
      %12 = vsyncadd [#allocation3], %s11
      %s13 = sshll.u32 [#allocation2], 4
      %s14 = int_to_ptr.vmem [resolvable:$true] %s13
      %19 = dma.hbm_to_vmem [thread:$0]  %s0, 4096, %s14, [#allocation3], 128, 128, 8
    $region5: #{tpu_custom_call.1} parent=1 // pred_fallthru
      _
    // Predicated region
    $region6: #{tpu_custom_call.1} parent=1 // pred_check
      _
    $region7: #{tpu_custom_call.1} parent=1 // pred_check_branch
      %21 = sbr.rel (0) target = $region9
    $region8: #{tpu_custom_call.1} parent=1 // pred_region
      %22 = dma.done [#allocation3], 4096
    $region9: #{tpu_custom_call.1} parent=1 // pred_fallthru
      _
    %v23 = vld [vmem:[#allocation2] sm:$0xff]
    %s24 = scalar_lea.vmem [#allocation2], 8
    %v25 = vld [vmem:[%s24] sm:$0xff]
    %s26 = scalar_lea.vmem [#allocation2], 16
    %v27 = vld [vmem:[%s26] sm:$0xff]
    %s28 = scalar_lea.vmem [#allocation2], 24
    %v29 = vld [vmem:[%s28] sm:$0xff]
    %s30 = scalar_lea.vmem [#allocation2], 32
    %v31 = vld [vmem:[%s30] sm:$0xff]
    %s32 = scalar_lea.vmem [#allocation2], 40
    %v33 = vld [vmem:[%s32] sm:$0xff]
    %s34 = scalar_lea.vmem [#allocation2], 48
    %v35 = vld [vmem:[%s34] sm:$0xff]
    %s36 = scalar_lea.vmem [#allocation2], 56
    %v37 = vld [vmem:[%s36] sm:$0xff]
    %v38 = vmax.f32 %v23, %v25
    %v39 = vmax.f32 %v38, %v27
    %v40 = vmax.f32 %v39, %v29
    %v41 = vmax.f32 %v40, %v31
    %v42 = vmax.f32 %v41, %v33
    %v43 = vmax.f32 %v42, %v35
    %v44 = vmax.f32 %v43, %v37
    %v45 = vsub.f32 %v23, %v44
    %v46 = vmul.f32 %v45, 1.442695
    %v47 = vpow.pop %v46
    %v48 = vsub.f32 %v25, %v44
    %v49 = vmul.f32 %v48, 1.442695
    %v50 = vpow.pop %v49
    %v51 = vsub.f32 %v27, %v44
    %v52 = vmul.f32 %v51, 1.442695
    %v53 = vpow.pop %v52
    %v54 = vsub.f32 %v29, %v44
    %v55 = vmul.f32 %v54, 1.442695
    %v56 = vpow.pop %v55
    %v57 = vsub.f32 %v31, %v44
    %v58 = vmul.f32 %v57, 1.442695
    %v59 = vpow.pop %v58
    %v60 = vsub.f32 %v33, %v44
    %v61 = vmul.f32 %v60, 1.442695
    %v62 = vpow.pop %v61
    %v63 = vsub.f32 %v35, %v44
    %v64 = vmul.f32 %v63, 1.442695
    %v65 = vpow.pop %v64
    %v66 = vsub.f32 %v37, %v44
    %v67 = vmul.f32 %v66, 1.442695
    %v68 = vpow.pop %v67
    %v69 = vadd.f32 %v47, %v50
    %v70 = vadd.f32 %v69, %v53
    %v71 = vadd.f32 %v70, %v56
    %v72 = vadd.f32 %v71, %v59
    %v73 = vadd.f32 %v72, %v62
    %v74 = vadd.f32 %v73, %v65
    %v75 = vadd.f32 %v74, %v68
    %v76 = vrcp.pop %v75
    %v77 = vmul.f32 %v50, %v76
    %v78 = vmul.f32 %v53, %v76
    %v79 = vmul.f32 %v56, %v76
    %v80 = vmul.f32 %v59, %v76
    %s81 = scalar_lea.vmem [#allocation2], 64
    %v82 = vld [vmem:[%s81] sm:$0xff]
    %s83 = scalar_lea.vmem [#allocation2], 72
    %v84 = vld [vmem:[%s83] sm:$0xff]
    %s85 = scalar_lea.vmem [#allocation2], 80
    %v86 = vld [vmem:[%s85] sm:$0xff]
    %s87 = scalar_lea.vmem [#allocation2], 88
    %v88 = vld [vmem:[%s87] sm:$0xff]
    %s89 = scalar_lea.vmem [#allocation2], 96
    %v90 = vld [vmem:[%s89] sm:$0xff]
    %s91 = scalar_lea.vmem [#allocation2], 104
    %v92 = vld [vmem:[%s91] sm:$0xff]
    %s93 = scalar_lea.vmem [#allocation2], 112
    %v94 = vld [vmem:[%s93] sm:$0xff]
    %s95 = scalar_lea.vmem [#allocation2], 120
    %v96 = vld [vmem:[%s95] sm:$0xff]
    %v97 = vmax.f32 %v82, %v84
    %v98 = vmax.f32 %v97, %v86
    %v99 = vmax.f32 %v98, %v88
    %v100 = vmax.f32 %v99, %v90
    %v101 = vmax.f32 %v100, %v92
    %v102 = vmax.f32 %v101, %v94
    %v103 = vmax.f32 %v102, %v96
    %v104 = vsub.f32 %v82, %v103
    %v105 = vmul.f32 %v104, 1.442695
    %v106 = vpow.pop %v105
    %v107 = vsub.f32 %v84, %v103
    %v108 = vmul.f32 %v107, 1.442695
    %v109 = vpow.pop %v108
    %v110 = vsub.f32 %v86, %v103
    %v111 = vmul.f32 %v110, 1.442695
    %v112 = vpow.pop %v111
    %v113 = vsub.f32 %v88, %v103
    %v114 = vmul.f32 %v113, 1.442695
    %v115 = vpow.pop %v114
    %v116 = vsub.f32 %v90, %v103
    %v117 = vmul.f32 %v116, 1.442695
    %v118 = vpow.pop %v117
    %v119 = vsub.f32 %v92, %v103
    %v120 = vmul.f32 %v119, 1.442695
    %v121 = vpow.pop %v120
    %v122 = vsub.f32 %v94, %v103
    %v123 = vmul.f32 %v122, 1.442695
    %v124 = vpow.pop %v123
    %v125 = vsub.f32 %v96, %v103
    %v126 = vmul.f32 %v125, 1.442695
    %v127 = vpow.pop %v126
    %v128 = vadd.f32 %v106, %v109
    %v129 = vadd.f32 %v128, %v112
    %v130 = vadd.f32 %v129, %v115
    %v131 = vadd.f32 %v130, %v118
    %v132 = vadd.f32 %v131, %v121
    %v133 = vadd.f32 %v132, %v124
    %v134 = vadd.f32 %v133, %v127
    %v135 = vrcp.pop %v134
    %v136 = vmul.f32 %v106, %v135
    %v137 = vmul.f32 %v112, %v135
    %v138 = vmul.f32 %v115, %v135
    %v139 = vmul.f32 %v118, %v135
    %s140 = scalar_lea.vmem [#allocation2], 128
    %v141 = vld [vmem:[%s140] sm:$0xff]
    %s142 = scalar_lea.vmem [#allocation2], 136
    %v143 = vld [vmem:[%s142] sm:$0xff]
    %s144 = scalar_lea.vmem [#allocation2], 144
    %v145 = vld [vmem:[%s144] sm:$0xff]
    %s146 = scalar_lea.vmem [#allocation2], 152
    %v147 = vld [vmem:[%s146] sm:$0xff]
    %s148 = scalar_lea.vmem [#allocation2], 160
    %v149 = vld [vmem:[%s148] sm:$0xff]
    %s150 = scalar_lea.vmem [#allocation2], 168
    %v151 = vld [vmem:[%s150] sm:$0xff]
    %s152 = scalar_lea.vmem [#allocation2], 176
    %v153 = vld [vmem:[%s152] sm:$0xff]
    %s154 = scalar_lea.vmem [#allocation2], 184
    %v155 = vld [vmem:[%s154] sm:$0xff]
    %v156 = vmax.f32 %v141, %v143
    %v157 = vmax.f32 %v156, %v145
    %v158 = vmax.f32 %v157, %v147
    %v159 = vmax.f32 %v158, %v149
    %v160 = vmax.f32 %v159, %v151
    %v161 = vmax.f32 %v160, %v153
    %v162 = vmax.f32 %v161, %v155
    %v163 = vsub.f32 %v141, %v162
    %v164 = vmul.f32 %v163, 1.442695
    %v165 = vpow.pop %v164
    %v166 = vsub.f32 %v143, %v162
    %v167 = vmul.f32 %v166, 1.442695
    %v168 = vpow.pop %v167
    %v169 = vsub.f32 %v145, %v162
    %v170 = vmul.f32 %v169, 1.442695
    %v171 = vpow.pop %v170
    %v172 = vsub.f32 %v147, %v162
    %v173 = vmul.f32 %v172, 1.442695
    %v174 = vpow.pop %v173
    %v175 = vsub.f32 %v149, %v162
    %v176 = vmul.f32 %v175, 1.442695
    %v177 = vpow.pop %v176
    %v178 = vsub.f32 %v151, %v162
    %v179 = vmul.f32 %v178, 1.442695
    %v180 = vpow.pop %v179
    %v181 = vsub.f32 %v153, %v162
    %v182 = vmul.f32 %v181, 1.442695
    %v183 = vpow.pop %v182
    %v184 = vsub.f32 %v155, %v162
    %v185 = vmul.f32 %v184, 1.442695
    %v186 = vpow.pop %v185
    %v187 = vadd.f32 %v165, %v168
    %v188 = vadd.f32 %v187, %v171
    %v189 = vadd.f32 %v188, %v174
    %v190 = vadd.f32 %v189, %v177
    %v191 = vadd.f32 %v190, %v180
    %v192 = vadd.f32 %v191, %v183
    %v193 = vadd.f32 %v192, %v186
    %v194 = vrcp.pop %v193
    %v195 = vmul.f32 %v165, %v194
    %v196 = vmul.f32 %v168, %v194
    %v197 = vmul.f32 %v174, %v194
    %v198 = vmul.f32 %v177, %v194
    %s199 = scalar_lea.vmem [#allocation2], 192
    %v200 = vld [vmem:[%s199] sm:$0xff]
    %s201 = scalar_lea.vmem [#allocation2], 200
    %v202 = vld [vmem:[%s201] sm:$0xff]
    %s203 = scalar_lea.vmem [#allocation2], 208
    %v204 = vld [vmem:[%s203] sm:$0xff]
    %s205 = scalar_lea.vmem [#allocation2], 216
    %v206 = vld [vmem:[%s205] sm:$0xff]
    %s207 = scalar_lea.vmem [#allocation2], 224
    %v208 = vld [vmem:[%s207] sm:$0xff]
    %s209 = scalar_lea.vmem [#allocation2], 232
    %v210 = vld [vmem:[%s209] sm:$0xff]
    %s211 = scalar_lea.vmem [#allocation2], 240
    %v212 = vld [vmem:[%s211] sm:$0xff]
    %s213 = scalar_lea.vmem [#allocation2], 248
    %v214 = vld [vmem:[%s213] sm:$0xff]
    %v215 = vmax.f32 %v200, %v202
    %v216 = vmax.f32 %v215, %v204
    %v217 = vmax.f32 %v216, %v206
    %v218 = vmax.f32 %v217, %v208
    %v219 = vmax.f32 %v218, %v210
    %v220 = vmax.f32 %v219, %v212
    %v221 = vmax.f32 %v220, %v214
    %v222 = vsub.f32 %v200, %v221
    %v223 = vmul.f32 %v222, 1.442695
    %v224 = vpow.pop %v223
    %v225 = vsub.f32 %v202, %v221
    %v226 = vmul.f32 %v225, 1.442695
    %v227 = vpow.pop %v226
    %v228 = vsub.f32 %v204, %v221
    %v229 = vmul.f32 %v228, 1.442695
    %v230 = vpow.pop %v229
    %v231 = vsub.f32 %v206, %v221
    %v232 = vmul.f32 %v231, 1.442695
    %v233 = vpow.pop %v232
    %v234 = vsub.f32 %v208, %v221
    %v235 = vmul.f32 %v234, 1.442695
    %v236 = vpow.pop %v235
    %v237 = vsub.f32 %v210, %v221
    %v238 = vmul.f32 %v237, 1.442695
    %v239 = vpow.pop %v238
    %v240 = vsub.f32 %v212, %v221
    %v241 = vmul.f32 %v240, 1.442695
    %v242 = vpow.pop %v241
    %v243 = vsub.f32 %v214, %v221
    %v244 = vmul.f32 %v243, 1.442695
    %v245 = vpow.pop %v244
    %v246 = vadd.f32 %v224, %v227
    %v247 = vadd.f32 %v246, %v230
    %v248 = vadd.f32 %v247, %v233
    %v249 = vadd.f32 %v248, %v236
    %v250 = vadd.f32 %v249, %v239
    %v251 = vadd.f32 %v250, %v242
    %v252 = vadd.f32 %v251, %v245
    %v253 = vrcp.pop %v252
    %v254 = vmul.f32 %v224, %v253
    %v255 = vmul.f32 %v227, %v253
    %v256 = vmul.f32 %v230, %v253
    %v257 = vmul.f32 %v236, %v253
    %v258 = vsub.f32 0.0, %v77
    %v259 = vsub.f32 0.0, %v78
    %v260 = vsub.f32 0.0, %v79
    %v261 = vsub.f32 0.0, %v136
    %v262 = vsub.f32 0.0, %v137
    %v263 = vsub.f32 0.0, %v138
    %v264 = vsub.f32 0.0, %v195
    %v265 = vsub.f32 0.0, %v196
    %v266 = vsub.f32 0.0, %v197
    %v267 = vsub.f32 0.0, %v254
    %v268 = vsub.f32 0.0, %v255
    %v269 = vsub.f32 0.0, %v256
    %v270 = vmul.f32 %v261, %v258
    %v271 = vsub.f32 1.0, %v270
    %v272 = vmul.f32 %v261, %v259
    %v273 = vsub.f32 %v262, %v272
    %v274 = vmul.f32 %v261, %v260
    %v275 = vsub.f32 %v263, %v274
    %v276 = vmul.f32 %v264, %v258
    %v277 = vsub.f32 %v265, %v276
    %v278 = vmul.f32 %v264, %v259
    %v279 = vsub.f32 1.0, %v278
    %v280 = vmul.f32 %v264, %v260
    %v281 = vsub.f32 %v266, %v280
    %v282 = vmul.f32 %v267, %v258
    %v283 = vsub.f32 %v268, %v282
    %v284 = vmul.f32 %v267, %v259
    %v285 = vsub.f32 %v269, %v284
    %v286 = vmul.f32 %v267, %v260
    %v287 = vsub.f32 1.0, %v286
    %v288 = vrcp.pop %v271
    %v289 = vmul.f32 1.0, %v288
    %v290 = vmul.f32 %v277, %v289
    %v291 = vmul.f32 %v290, %v273
    %v292 = vsub.f32 %v279, %v291
    %v293 = vmul.f32 %v290, %v275
    %v294 = vsub.f32 %v281, %v293
    %v295 = vmul.f32 %v283, %v289
    %v296 = vmul.f32 %v295, %v273
    %v297 = vsub.f32 %v285, %v296
    %v298 = vmul.f32 %v295, %v275
    %v299 = vsub.f32 %v287, %v298
    %v300 = vrcp.pop %v292
    %v301 = vmul.f32 1.0, %v300
    %v302 = vmul.f32 %v297, %v301
    %v303 = vmul.f32 %v302, %v294
    %v304 = vsub.f32 %v299, %v303
    %v305 = vrcp.pop 1.0
    %v306 = vmul.f32 %v77, %v305
    %v307 = vlog2.pop %v306
    %v308 = vmul.f32 %v307, 0.6931472
    %v309 = vmul.f32 %v261, %v78
    %v310 = vsub.f32 %v137, %v309
    %v311 = vrcp.pop %v271
    %v312 = vmul.f32 %v310, %v311
    %v313 = vlog2.pop %v312
    %v314 = vmul.f32 %v313, 0.6931472
    %v315 = vadd.f32 %v308, %v314
    %v316 = vmul.f32 %v261, %v79
    %v317 = vsub.f32 %v138, %v316
    %v318 = vmul.f32 %v264, %v79
    %v319 = vsub.f32 %v197, %v318
    %v320 = vmul.f32 %v290, %v317
    %v321 = vsub.f32 %v319, %v320
    %v322 = vrcp.pop %v292
    %v323 = vmul.f32 %v321, %v322
    %v324 = vlog2.pop %v323
    %v325 = vmul.f32 %v324, 0.6931472
    %v326 = vadd.f32 %v315, %v325
    %v327 = vmul.f32 %v261, %v80
    %v328 = vsub.f32 %v139, %v327
    %v329 = vmul.f32 %v264, %v80
    %v330 = vsub.f32 %v198, %v329
    %v331 = vmul.f32 %v290, %v328
    %v332 = vsub.f32 %v330, %v331
    %v333 = vmul.f32 %v267, %v80
    %v334 = vsub.f32 %v257, %v333
    %v335 = vmul.f32 %v295, %v328
    %v336 = vsub.f32 %v334, %v335
    %v337 = vmul.f32 %v302, %v332
    %v338 = vsub.f32 %v336, %v337
    %v339 = vrcp.pop %v304
    %v340 = vmul.f32 %v338, %v339
    %v341 = vlog2.pop %v340
    %v342 = vmul.f32 %v341, 0.6931472
    %v343 = vadd.f32 %v326, %v342
    %344 = vst [vmem:[#allocation5] sm:$0xff] %v343
    // Predicated region
    $region10: #{tpu_custom_call.1} parent=1 // pred_check
      _
    $region11: #{tpu_custom_call.1} parent=1 // pred_check_branch
      %346 = sbr.rel (0) target = $region13
    $region12: #{tpu_custom_call.1} parent=1 // pred_region
      %s348 = ssub.s32 128, 128
      %349 = vsyncadd [#allocation4], %s348
      %s351 = sshll.u32 [#allocation5], 4
      %s352 = int_to_ptr.vmem [resolvable:$true] %s351
      %354 = dma.vmem_to_hbm [thread:$0]  %s352, 128, %s1, [#allocation4]
    $region13: #{tpu_custom_call.1} parent=1 // pred_fallthru
      _
    // Predicated region
    $region14: #{tpu_custom_call.1} parent=1 // pred_check
      _
    $region15: #{tpu_custom_call.1} parent=1 // pred_check_branch
      %356 = sbr.rel (0) target = $region17
    $region16: #{tpu_custom_call.1} parent=1 // pred_region
      %357 = dma.done [#allocation4], 128
    $region17: #{tpu_custom_call.1} parent=1 // pred_fallthru
      _
    %358 = vsyncpa [#allocation3], 1
    %359 = vsyncpa [#allocation4], 1

</llo_original>
